<compile_context>
chip_gen: v6e
topology: v6e:2x2x1
jax: 0.10.0
libtpu: 0.0.40
codegen_flags: <defaults>
</compile_context>

<pallas_src>
import functools

import jax
import jax.numpy as jnp
from jax.experimental import pallas as pl
from jax.experimental.pallas import tpu as pltpu


def _label_smoothing_ce_kernel(pred_ref, tgt_ref, out_ref, *,
                               off_value, confidence, n_total, block_rows):
    i = pl.program_id(0)

    pred = pred_ref[...].astype(jnp.float32)      # (TN, C), cast per-tile
    tgt = tgt_ref[...]                            # (TN, 1) int32
    tn, c = pred.shape

    # Numerically-stable pieces of log_softmax (no full logp materialized).
    m = jnp.max(pred, axis=-1, keepdims=True)                          # (TN, 1)
    shifted = pred - m                                                 # (TN, C)
    lse = jnp.log(jnp.sum(jnp.exp(shifted), axis=-1, keepdims=True))   # (TN, 1)

    # Fused weighted reduction: true_dist sums to 1, so
    #   loss_row = sum(true_dist * (lse - shifted)) = lse - sum(w * shifted)
    col = jax.lax.broadcasted_iota(jnp.int32, (tn, c), 1)
    w = jnp.where(col == tgt, confidence, off_value)                   # (TN, C)
    weighted = jnp.sum(w * shifted, axis=-1, keepdims=True)            # (TN, 1)

    per_row = lse - weighted                                           # (TN, 1)

    # Mask rows past the true batch size (partial last tile) BEFORE they can
    # reach the wrapper-side sum.
    row = i * block_rows + jax.lax.broadcasted_iota(jnp.int32, (tn, 1), 0)
    out_ref[...] = jnp.where(row < n_total, per_row, 0.0)


def label_smoothing_cross_entropy(pred, target, *, classes, smoothing=0.1,
                                  block_rows=None):
    """pred: (N, C) float (any dtype), target: (N,) int.  Scalar f32 loss."""
    n, c = pred.shape
    assert c == classes and c > 1  # off_value = smoothing / (C - 1)
    confidence = 1.0 - smoothing
    off_value = smoothing / (c - 1)

    itemsize = jnp.dtype(pred.dtype).itemsize
    # Sublane-pack multiple for the pred dtype (8 f32 / 16 bf16 / 32 int8).
    # int32 target and f32 output need 8, which all of these satisfy.
    sub = max(8, 32 // itemsize)

    if block_rows is None:
        # Budget on the f32 in-kernel tile (block_rows * C * 4 bytes): the
        # body holds ~3-4 live (TN, C) f32 temporaries plus the 2x
        # double-buffered native input, so a ~4 MiB f32 tile keeps the total
        # working set ~<28 MiB -- safe on v5e/v6e/v7x. Tile sweeps show ~85%
        # of HBM roofline is reached well below this size, so no upper cap
        # beyond the byte budget.
        f32_tile_budget = 4 * 1024 * 1024
        block_rows = max(sub, (f32_tile_budget // (c * 4)) // sub * sub)
    else:
        block_rows = int(block_rows)
        if block_rows < n and block_rows % sub:
            # Round up to a legal sublane multiple for this dtype.
            block_rows = -(-block_rows // sub) * sub

    if block_rows >= n:
        # Prefer >= 2 grid tiles when N allows a legal split so the single
        # "parallel" batch axis shards across both TensorCores on v7x.
        ceil_half = -(-n // 2)
        half_rounded = -(-ceil_half // sub) * sub
        block_rows = half_rounded if half_rounded < n else n

    num_tiles = -(-n // block_rows)

    tgt2d = target.astype(jnp.int32).reshape(n, 1)

    kernel = functools.partial(
        _label_smoothing_ce_kernel,
        off_value=float(off_value),
        confidence=float(confidence),
        n_total=int(n),
        block_rows=int(block_rows),
    )

    out = pl.pallas_call(
        kernel,
        out_shape=jax.ShapeDtypeStruct((num_tiles * block_rows, 1), jnp.float32),
        grid=(num_tiles,),
        in_specs=[
            pl.BlockSpec((block_rows, c), lambda i: (i, 0)),
            pl.BlockSpec((block_rows, 1), lambda i: (i, 0)),
        ],
        out_specs=pl.BlockSpec((block_rows, 1), lambda i: (i, 0)),
        compiler_params=pltpu.CompilerParams(
            dimension_semantics=("parallel",),
            # Headroom over the 32 MiB scoped default; still safe on v7x's
            # 64 MiB physical VMEM given the ~4 MiB f32 tile budget above.
            vmem_limit_bytes=48 * 1024 * 1024,
        ),
        cost_estimate=pl.CostEstimate(
            # ~10 flops/element: max, sub, exp feed, cmp, select, weighted
            # mul, two lane reduces; plus per-row ops.
            flops=10 * n * c,
            # exp per element + log per row.
            transcendentals=n * c + n,
            bytes_accessed=n * c * itemsize + n * 4 + num_tiles * block_rows * 4,
        ),
    )(pred, tgt2d)

    # Final mean over the true batch size (padded rows were zeroed in-kernel).
    return jnp.sum(out) / n


def _reference(pred, target, *, classes, smoothing=0.1):
    confidence = 1.0 - smoothing
    logp = jax.nn.log_softmax(pred.astype(jnp.float32), axis=-1)
    off = smoothing / (classes - 1)
    true_dist = jnp.full_like(logp, off)
    true_dist = true_dist.at[jnp.arange(pred.shape[0]), target].set(confidence)
    return jnp.mean(jnp.sum(-true_dist * logp, axis=-1))


if __name__ == "__main__":
    key = jax.random.PRNGKey(0)
    k1, k2, k3, k4, k5, k6 = jax.random.split(key, 6)

    # Case 1: f32 logits, explicit block_rows, batch tiled evenly into 2 tiles.
    N1, C1 = 16, 128
    pred1 = jax.random.normal(k1, (N1, C1), dtype=jnp.float32)
    tgt1 = jax.random.randint(k2, (N1,), 0, C1, dtype=jnp.int32)
    loss1 = jax.block_until_ready(
        label_smoothing_cross_entropy(pred1, tgt1, classes=C1, smoothing=0.1,
                                      block_rows=8))
    ref1 = _reference(pred1, tgt1, classes=C1, smoothing=0.1)
    assert jnp.allclose(loss1, ref1, atol=1e-5, rtol=1e-5), (loss1, ref1)

    # Case 2: bf16 logits in native dtype (cast in-kernel), batch not divisible
    # by the tile -> exercises the partial-last-tile masking path.
    N2, C2 = 24, 128
    pred2 = jax.random.normal(k3, (N2, C2), dtype=jnp.float32).astype(jnp.bfloat16)
    tgt2 = jax.random.randint(k4, (N2,), 0, C2, dtype=jnp.int32)
    loss2 = jax.block_until_ready(
        label_smoothing_cross_entropy(pred2, tgt2, classes=C2, smoothing=0.1,
                                      block_rows=16))
    ref2 = _reference(pred2.astype(jnp.float32), tgt2, classes=C2, smoothing=0.1)
    assert jnp.allclose(loss2, ref2, atol=1e-4, rtol=1e-4), (loss2, ref2)

    # Case 3: auto block_rows -> exercises the f32-footprint budget and the
    # "force >= 2 tiles for megacore" split (24 + partial 16 of 40 rows).
    N3, C3 = 40, 256
    pred3 = jax.random.normal(k5, (N3, C3), dtype=jnp.float32)
    tgt3 = jax.random.randint(k6, (N3,), 0, C3, dtype=jnp.int32)
    loss3 = jax.block_until_ready(
        label_smoothing_cross_entropy(pred3, tgt3, classes=C3, smoothing=0.1))
    ref3 = _reference(pred3, tgt3, classes=C3, smoothing=0.1)
    assert jnp.allclose(loss3, ref3, atol=1e-5, rtol=1e-5), (loss3, ref3)

    print("KERNEL_OK")
</pallas_src>

<mosaic_0001>
module attributes {stable_mosaic.version = 11 : i64} {
  func.func @_label_smoothing_ce_kernel(%arg0: i32, %arg1: memref<8x128xf32, #tpu.memory_space<vmem>>, %arg2: memref<8x1xi32, #tpu.memory_space<vmem>>, %arg3: memref<8x1xf32, #tpu.memory_space<vmem>>) attributes {dimension_semantics = [#tpu.dimension_semantics<parallel>], iteration_bounds = array<i64: 2>, scalar_prefetch = 0 : i64, scratch_operands = 0 : i64, tpu.core_type = #tpu.core_type<tc>, window_params = [{transform_indices = @transform_0, window_bounds = array<i64: 8, 128>}, {transform_indices = @transform_1, window_bounds = array<i64: 8, 1>}, {transform_indices = @transform_2, window_bounds = array<i64: 8, 1>}]} {
    %c0 = arith.constant 0 : index
    %c0_0 = arith.constant 0 : index
    %0 = vector.load %arg1[%c0, %c0_0] : memref<8x128xf32, #tpu.memory_space<vmem>>, vector<8x128xf32>
    %c0_1 = arith.constant 0 : index
    %c0_2 = arith.constant 0 : index
    %1 = vector.load %arg2[%c0_1, %c0_2] : memref<8x1xi32, #tpu.memory_space<vmem>>, vector<8x1xi32>
    %cst = arith.constant dense<0xFF800000> : vector<8xf32>
    %2 = vector.multi_reduction <maximumf>, %0, %cst [1] : vector<8x128xf32> to vector<8xf32>
    %3 = vector.shape_cast %2 : vector<8xf32> to vector<8x1xf32>
    %4 = vector.broadcast %3 : vector<8x1xf32> to vector<8x128xf32>
    %5 = arith.subf %0, %4 : vector<8x128xf32>
    %6 = math.exp %5 : vector<8x128xf32>
    %cst_3 = arith.constant dense<0.000000e+00> : vector<8xf32>
    %7 = vector.multi_reduction <add>, %6, %cst_3 [1] : vector<8x128xf32> to vector<8xf32>
    %8 = vector.shape_cast %7 : vector<8xf32> to vector<8x1xf32>
    %9 = math.log %8 : vector<8x1xf32>
    %10 = tpu.iota {dimensions = array<i32: 1>} : vector<8x128xi32>
    %11 = vector.broadcast %1 : vector<8x1xi32> to vector<8x128xi32>
    %12 = arith.cmpi eq, %10, %11 : vector<8x128xi32>
    %cst_4 = arith.constant 0.899999976 : f32
    %cst_5 = arith.constant 7.87401571E-4 : f32
    %13 = vector.broadcast %cst_4 : f32 to vector<8x128xf32>
    %14 = vector.broadcast %cst_5 : f32 to vector<8x128xf32>
    %15 = arith.select %12, %13, %14 : vector<8x128xi1>, vector<8x128xf32>
    %16 = arith.mulf %15, %5 : vector<8x128xf32>
    %cst_6 = arith.constant dense<0.000000e+00> : vector<8xf32>
    %17 = vector.multi_reduction <add>, %16, %cst_6 [1] : vector<8x128xf32> to vector<8xf32>
    %18 = vector.shape_cast %17 : vector<8xf32> to vector<8x1xf32>
    %19 = arith.subf %9, %18 : vector<8x1xf32>
    %c8_i32 = arith.constant 8 : i32
    %20 = arith.muli %arg0, %c8_i32 : i32
    %21 = tpu.iota {dimensions = array<i32: 0>} : vector<8x1xi32>
    %22 = vector.broadcast %20 : i32 to vector<8x1xi32>
    %23 = arith.addi %22, %21 : vector<8x1xi32>
    %c16_i32 = arith.constant 16 : i32
    %24 = vector.broadcast %c16_i32 : i32 to vector<8x1xi32>
    %25 = arith.cmpi slt, %23, %24 : vector<8x1xi32>
    %cst_7 = arith.constant 0.000000e+00 : f32
    %26 = vector.broadcast %cst_7 : f32 to vector<8x1xf32>
    %27 = arith.select %25, %19, %26 : vector<8x1xi1>, vector<8x1xf32>
    %c0_8 = arith.constant 0 : index
    %c0_9 = arith.constant 0 : index
    %28 = vector.load %arg3[%c0_8, %c0_9] : memref<8x1xf32, #tpu.memory_space<vmem>>, vector<8x1xf32>
    tpu.vector_store %arg3[%c0_8, %c0_9], %27 {strides = array<i32>} : memref<8x1xf32, #tpu.memory_space<vmem>>, vector<8x1xf32>,
    return
  }
  func.func @transform_0(%arg0: i32) -> (i32, i32) {
    %c0_i32 = arith.constant 0 : i32
    %c0_i32_0 = arith.constant 0 : i32
    return %arg0, %c0_i32 : i32, i32
  }
  func.func @transform_1(%arg0: i32) -> (i32, i32) {
    %c0_i32 = arith.constant 0 : i32
    %c0_i32_0 = arith.constant 0 : i32
    return %arg0, %c0_i32 : i32, i32
  }
  func.func @transform_2(%arg0: i32) -> (i32, i32) {
    %c0_i32 = arith.constant 0 : i32
    %c0_i32_0 = arith.constant 0 : i32
    return %arg0, %c0_i32 : i32, i32
  }
}

</mosaic_0001>

<llo_original>
// kernel: tpu_custom_call.1
$region0: #{tpu_custom_call.1}
  #allocation0 [shape = 'u32[]', space=smem, size = 0x4, offset = 0x4, fixed_abs, tag = 'smem constant byte address 0x4 - core index']
  #allocation1 [shape = 'u32[144,128]{1,0:T(1,128)}', space=vmem, size = 0x12000, scoped, tag = 'internal scratch']
  %s0 = inlined_call_operand.vmem [shape: f32[16,128], index: 0, kind: input, shape index: {}]
  %s1 = inlined_call_operand.vmem [shape: s32[16,1], index: 1, kind: input, shape index: {}]
  %s2 = inlined_call_operand.vmem [shape: f32[16,1], index: 2, kind: output, shape index: {}]
  %s3 = sld [smem:[#allocation0]]
  $region41: #{tpu_custom_call.1} parent=0
    _
  %s5 = ssub.s32 1, %s3
  %s6 = scalar_select 0, %s5, %s3
  loop: start=0, step=1, limit=4
  $region2: #{tpu_custom_call.1} parent=0 // loop_pre_header
    _
  $region3: #{tpu_custom_call.1} parent=0 // loop_header
    %s8 = sphi 0, %s12
    %p9 = scmp.ge.s32.totalorder %s8, 4
    %s18 = sphi 0, %s20
    %s21 = sphi 0, %s18
    %s22 = sphi 0, %s21
    %s38 = sphi 0, %s22
    %s44 = sphi 0, %s46
    %s47 = sphi 0, %s44
    %s48 = sphi 0, %s47
    %s64 = sphi 0, %s48
    %s70 = sphi 0, %s72
    %s73 = sphi 0, %s70
    %s74 = sphi 0, %s73
    %s90 = sphi 0, %s74
  $region4: #{tpu_custom_call.1} parent=0 // loop_header_branch
    %11 = sbr.rel (%p9) target = $region8
  $region5: #{tpu_custom_call.1} parent=0 // loop_body
    %s13 = ssub.s32 %s8, 1
    %s14 = ssub.s32 %s8, 2
    %s15 = sadd.s32 %s8, 1
    %s16 = ssub.s32 %s8, %s15
    %p17 = scmp.eq.s32.totalorder %s16, 0
    %s19 = sadd.s32 %s18, 1
    %s20 = scalar_select %p17, %s18, %s19
    %p23 = pneg %p17
    %p24 = scmp.eq.s32.totalorder %s8, 1
    %p25 = por %p23, %p24
    %p26 = scmp.ne.s32.totalorder %s18, %s21
    %p27 = scmp.eq.s32.totalorder %s8, 0
    %p28 = por %p26, %p27
    %p29 = scmp.ne.s32.totalorder %s18, %s21
    %p30 = scmp.eq.s32.totalorder %s13, 1
    %p31 = por %p29, %p30
    %p32 = scmp.ne.s32.totalorder %s21, %s22
    %p33 = scmp.eq.s32.totalorder %s13, 0
    %p34 = por %p32, %p33
    %p35 = scmp.ne.s32.totalorder %s21, %s22
    %p36 = scmp.eq.s32.totalorder %s14, 1
    %p37 = por %p35, %p36
    %p39 = scmp.ne.s32.totalorder %s22, %s38
    %p40 = scmp.eq.s32.totalorder %s14, 0
    %p41 = por %p39, %p40
    %s42 = ssub.s32 %s8, %s15
    %p43 = scmp.eq.s32.totalorder %s42, 0
    %s45 = sadd.s32 %s44, 1
    %s46 = scalar_select %p43, %s44, %s45
    %p49 = pneg %p43
    %p50 = scmp.eq.s32.totalorder %s8, 1
    %p51 = por %p49, %p50
    %p52 = scmp.ne.s32.totalorder %s44, %s47
    %p53 = scmp.eq.s32.totalorder %s8, 0
    %p54 = por %p52, %p53
    %p55 = scmp.ne.s32.totalorder %s44, %s47
    %p56 = scmp.eq.s32.totalorder %s13, 1
    %p57 = por %p55, %p56
    %p58 = scmp.ne.s32.totalorder %s47, %s48
    %p59 = scmp.eq.s32.totalorder %s13, 0
    %p60 = por %p58, %p59
    %p61 = scmp.ne.s32.totalorder %s47, %s48
    %p62 = scmp.eq.s32.totalorder %s14, 1
    %p63 = por %p61, %p62
    %p65 = scmp.ne.s32.totalorder %s48, %s64
    %p66 = scmp.eq.s32.totalorder %s14, 0
    %p67 = por %p65, %p66
    %s68 = ssub.s32 %s8, %s15
    %p69 = scmp.eq.s32.totalorder %s68, 0
    %s71 = sadd.s32 %s70, 1
    %s72 = scalar_select %p69, %s70, %s71
    %p75 = pneg %p69
    %p76 = scmp.eq.s32.totalorder %s8, 1
    %p77 = por %p75, %p76
    %p78 = scmp.ne.s32.totalorder %s70, %s73
    %p79 = scmp.eq.s32.totalorder %s8, 0
    %p80 = por %p78, %p79
    %p81 = scmp.ne.s32.totalorder %s70, %s73
    %p82 = scmp.eq.s32.totalorder %s13, 1
    %p83 = por %p81, %p82
    %p84 = scmp.ne.s32.totalorder %s73, %s74
    %p85 = scmp.eq.s32.totalorder %s13, 0
    %p86 = por %p84, %p85
    %p87 = scmp.ne.s32.totalorder %s73, %s74
    %p88 = scmp.eq.s32.totalorder %s14, 1
    %p89 = por %p87, %p88
    %p91 = scmp.ne.s32.totalorder %s74, %s90
    %p92 = scmp.eq.s32.totalorder %s14, 0
    %p93 = por %p91, %p92
    %p94 = scmp.le.s32.totalorder 1, %s8
    %p95 = scmp.lt.s32.totalorder %s8, 3
    %p96 = pnand %p94, %p95
    %p97 = pneg %p96
    // Predicated region
    $region9: #{tpu_custom_call.1} parent=5 // pred_check
      _
    $region10: #{tpu_custom_call.1} parent=5 // pred_check_branch
      %99 = sbr.rel (%p96) target = $region12
    $region11: #{tpu_custom_call.1} parent=5 // pred_region
      %s100 = ssub.s32 %s8, 1
    $region12: #{tpu_custom_call.1} parent=5 // pred_fallthru
      _
    %p101 = scmp.lt.s32.totalorder %s8, 2
    // Predicated region
    $region13: #{tpu_custom_call.1} parent=5 // pred_check
      %p102 = pneg %p101
    $region14: #{tpu_custom_call.1} parent=5 // pred_check_branch
      %104 = sbr.rel (%p102) target = $region16
    $region15: #{tpu_custom_call.1} parent=5 // pred_region
      // Predicated region
      $region17: #{tpu_custom_call.1} parent=15 // pred_check
        %p105 = pneg %p28
      $region18: #{tpu_custom_call.1} parent=15 // pred_check_branch
        %107 = sbr.rel (%p105) target = $region20
      $region19: #{tpu_custom_call.1} parent=15 // pred_region
        %p108 = scmp.lt.s32.totalorder %s8, 1
        %s109 = scalar_select %p108, %s8, 1
        %s110 = smul.addr %s109, 8
        %s111 = scalar_lea.vmem %s0, %s110
      $region20: #{tpu_custom_call.1} parent=15 // pred_fallthru
        _
      // Predicated region
      $region21: #{tpu_custom_call.1} parent=15 // pred_check
        %p112 = pneg %p54
      $region22: #{tpu_custom_call.1} parent=15 // pred_check_branch
        %114 = sbr.rel (%p112) target = $region24
      $region23: #{tpu_custom_call.1} parent=15 // pred_region
        %p115 = scmp.lt.s32.totalorder %s8, 1
        %s116 = scalar_select %p115, %s8, 1
        %s117 = smul.addr %s116, 8
        %s118 = scalar_lea.vmem %s1, %s117
      $region24: #{tpu_custom_call.1} parent=15 // pred_fallthru
        _
    $region16: #{tpu_custom_call.1} parent=5 // pred_fallthru
      _
    %p119 = scmp.le.s32.totalorder 1, %s8
    %p120 = scmp.lt.s32.totalorder %s8, 3
    %p121 = pnand %p119, %p120
    %p122 = pneg %p121
    // Predicated region
    $region25: #{tpu_custom_call.1} parent=5 // pred_check
      _
    $region26: #{tpu_custom_call.1} parent=5 // pred_check_branch
      %124 = sbr.rel (%p121) target = $region28
    $region27: #{tpu_custom_call.1} parent=5 // pred_region
      %s125 = ssub.s32 %s8, 1
      %p126 = scmp.lt.s32.totalorder %s13, 1
      %s127 = scalar_select %p126, %s13, 1
      %s128 = smul.addr %s127, 8
      %s129 = scalar_lea.vmem %s0, %s128
      %p130 = pneg %p34
      %p131 = pneg %p31
      %p132 = scmp.lt.s32.totalorder %s13, 1
      %s133 = scalar_select %p132, %s13, 1
      %s134 = smul.addr %s133, 8
      %s135 = scalar_lea.vmem %s1, %s134
      %p136 = pneg %p60
      %p137 = pneg %p57
      %p138 = pneg %p86
      %p139 = pneg %p83
      %p140 = scmp.lt.s32.totalorder %s13, 1
      %s141 = scalar_select %p140, %s13, 1
      %s142 = smul.addr %s141, 8
      %s143 = scalar_lea.vmem %s2, %s142
      %p144 = scmp.lt.s32.totalorder %s13, 1
      %s145 = scalar_select %p144, %s13, 1
      %s146 = smul.addr %s145, 8
      %s147 = scalar_lea.vmem %s0, %s146
      %p148 = scmp.lt.s32.totalorder %s13, 1
      %s149 = scalar_select %p148, %s13, 1
      %s150 = smul.addr %s149, 8
      %s151 = scalar_lea.vmem %s1, %s150
      %p152 = scmp.lt.s32.totalorder %s13, 1
      %s153 = scalar_select %p152, %s13, 1
      %s154 = smul.addr %s153, 8
      %s155 = scalar_lea.vmem %s2, %s154
      %v156 = vld [vmem:[%s147] sm:$0xff]
      %v157 = vld [vmem:[%s151] sm:$0xff]
      %158 = vmax.xlane.f32.xlu0 %v156
      %v159 = vpop.xlane.xlu0 %158
      %v160 = vsub.f32 %v156, %v159
      %v161 = vmul.f32 %v160, 1.442695
      %v162 = vpow.pop %v161
      %163 = vadd.xlane.f32.xlu0 %v162
      %v164 = vpop.xlane.xlu0 %163
      %v165 = vlog2.pop %v164
      %v166 = vmul.f32 %v165, 0.6931472
      %v167 = vlaneseq
      %v168 = vand.u32 %v167, 127
      %169 = vset.pattern.permute.xlu0 0
      %170 = vperm.xlu0 %169, %v157
      %v171 = vpop.permute.xlu0 %170
      %vm172 = vcmp.eq.s32.totalorder %v168, %v171
      %v173 = vsel %vm172, 0.9, 0.0007874016
      %v174 = vmul.f32 %v173, %v160
      %175 = vadd.xlane.f32.xlu0 %v174
      %v176 = vpop.xlane.xlu0 %175
      %v177 = vsub.f32 %v166, %v176
      %s178 = smul.u32 %s13, 8
      %v179 = vlaneseq
      %v180 = vshrl.u32 %v179, 7
      %v181 = vstv %s178
      %v182 = vadd.s32 %v181, %v180
      %vm183 = vcmp.lt.s32.totalorder %v182, 16
      %v184 = vsel %vm183, %v177, 0.0
      %vm185 = vcmask 7168
      %186 = vst.msk [vmem:[%s155] sm:$0xff] %vm185, %v184
      %p187 = scmp.lt.s32.totalorder %s13, 1
      %s188 = scalar_select %p187, %s13, 1
      %s189 = smul.addr %s188, 8
      %s190 = scalar_lea.vmem %s2, %s189
      // Predicated region
      $region29: #{tpu_custom_call.1} parent=27 // pred_check
        %p191 = pneg %p83
      $region30: #{tpu_custom_call.1} parent=27 // pred_check_branch
        %193 = sbr.rel (%p191) target = $region32
      $region31: #{tpu_custom_call.1} parent=27 // pred_region
        _
      $region32: #{tpu_custom_call.1} parent=27 // pred_fallthru
        _
    $region28: #{tpu_custom_call.1} parent=5 // pred_fallthru
      _
    %p194 = scmp.le.s32.totalorder 2, %s8
    // Predicated region
    $region33: #{tpu_custom_call.1} parent=5 // pred_check
      %p195 = pneg %p194
    $region34: #{tpu_custom_call.1} parent=5 // pred_check_branch
      %197 = sbr.rel (%p195) target = $region36
    $region35: #{tpu_custom_call.1} parent=5 // pred_region
      %s198 = ssub.s32 %s8, 2
      // Predicated region
      $region37: #{tpu_custom_call.1} parent=35 // pred_check
        %p199 = pneg %p89
      $region38: #{tpu_custom_call.1} parent=35 // pred_check_branch
        %201 = sbr.rel (%p199) target = $region40
      $region39: #{tpu_custom_call.1} parent=35 // pred_region
        %p202 = scmp.lt.s32.totalorder %s14, 1
        %s203 = scalar_select %p202, %s14, 1
        %s204 = smul.addr %s203, 8
        %s205 = scalar_lea.vmem %s2, %s204
      $region40: #{tpu_custom_call.1} parent=35 // pred_fallthru
        _
    $region36: #{tpu_custom_call.1} parent=5 // pred_fallthru
      _
  $region6: #{tpu_custom_call.1} parent=0 // loop_footer
    %s12 = sadd.s32 1, %s8
  $region7: #{tpu_custom_call.1} parent=0 // loop_footer_branch
    %7 = sbr.rel target = $region3
  $region8: #{tpu_custom_call.1} parent=0 // loop_exit
    _

</llo_original>
